<compile_context>
chip_gen: v7x
topology: tpu7x:2x2x1
jax: 0.10.0
libtpu: 0.0.40
codegen_flags: <defaults>
</compile_context>

<pallas_src>
import math
from functools import partial

import jax
import jax.numpy as jnp
from jax.experimental import pallas as pl
from jax.experimental.pallas import tpu as pltpu


# ----------------------------------------------------------------------------
# Kernel
# ----------------------------------------------------------------------------
def _pooling_voting_kernel(x_ref, wc_t_ref, bc_ref, sel_ref, w1_t_ref, b1_ref,
                           o_ref):
    # x_ref:    (TN*L, C)        flattened batch-of-timesteps block (bf16/f32)
    # wc_t_ref: (C, F_PAD)       Conv1d(k=1) weight, transposed + lane-padded
    # bc_ref:   (1, F_PAD)       Conv1d bias (f32, zero in padded lanes)
    # sel_ref:  (3, F_PAD)       softmax(pool_selector).T (f32, zero padded)
    # w1_t_ref: (F_PAD, OUT_PAD) fc1 weight, transposed, zero rows for pad F
    # b1_ref:   (1, OUT_PAD)     fc1 bias (f32, zero in padded lanes)
    # o_ref:    (1, TN, OUT_PAD) f32 output block
    rows = x_ref.shape[0]
    f_pad = wc_t_ref.shape[1]
    tn = o_ref.shape[1]
    seq_len = rows // tn

    # Conv1d(kernel_size=1) == one (TN*L, C) @ (C, F_PAD) MXU matmul,
    # bf16 operands, f32 accumulation.
    y = jnp.dot(x_ref[...], wc_t_ref[...],
                preferred_element_type=jnp.float32) + bc_ref[...]     # (TN*L, F_PAD)
    y3 = y.reshape(tn, seq_len, f_pad)                                # (TN, L, F_PAD)

    # mean / max / min pooling over the time axis L (per batch element).
    gap = jnp.sum(y3, axis=1) * (1.0 / seq_len)                       # (TN, F_PAD)
    mx = jnp.max(y3, axis=1)
    mn = jnp.min(y3, axis=1)

    sel = sel_ref[...]                                                # pre-softmaxed
    pooled = gap * sel[0:1, :] + mx * sel[1:2, :] + mn * sel[2:3, :]  # (TN, F_PAD)

    # fc1: (TN, F_PAD) @ (F_PAD, OUT_PAD), lane-dense unmasked writeback.
    out = jnp.dot(pooled.astype(w1_t_ref.dtype), w1_t_ref[...],
                  preferred_element_type=jnp.float32) + b1_ref[...]   # (TN, OUT_PAD)
    o_ref[0] = out


# ----------------------------------------------------------------------------
# Tiling heuristics
# ----------------------------------------------------------------------------
_VMEM_BUDGET = 24 * 1024 * 1024  # per-step footprint budget; kernel sets
                                 # vmem_limit_bytes = 32 MiB, < 64 MiB v7x
                                 # physical and raises v5e's 16 MiB default.


def _round_up(n, m):
    return ((n + m - 1) // m) * m


def _step_vmem_bytes(tn, seq_len, c_in, f_pad, out_pad, x_elt):
    rows = tn * seq_len
    x_tile = 2 * rows * c_in * x_elt                    # double-buffered x block
    y_interm = rows * f_pad * 4                         # f32 conv intermediate
    pools = 8 * tn * f_pad * 4                          # gap/max/min/pooled + slack
    out_tile = 2 * tn * out_pad * 4                     # double-buffered output
    weights = 2 * (c_in * f_pad * x_elt + f_pad * out_pad * x_elt
                   + (4 * f_pad + out_pad) * 4)
    return x_tile + y_interm + pools + out_tile + weights


def _choose_tile_n(n, seq_len, c_in, f_pad, out_pad, x_elt,
                   budget=_VMEM_BUDGET, target_rows=2048):
    """Batch elements per grid step.

    Whole batch in a single grid step whenever it fits the VMEM budget (the
    common / demo case: no per-step overhead, block == full array so no
    (8,128) constraint).  Otherwise aim for ~2048 MXU rows per step, keep
    (TN*L) % 8 == 0 for the flattened x block, and prefer a TN dividing N so
    x is never jnp.pad-ed in HBM."""
    if _step_vmem_bytes(n, seq_len, c_in, f_pad, out_pad, x_elt) <= budget:
        return n
    sub = 8 // math.gcd(seq_len, 8)          # sublane legality for grid > 1
    tn = max(sub, min(n, max(1, target_rows // seq_len)) // sub * sub)
    while tn > sub and _step_vmem_bytes(tn, seq_len, c_in, f_pad, out_pad,
                                        x_elt) > budget:
        tn -= sub
    for cand in range(tn, max(sub, tn // 2) - 1, -sub):
        if n % cand == 0:                    # no padding of x needed
            return cand
    return tn                                # fallback: pad the last block


# ----------------------------------------------------------------------------
# Forward (jitted) + parameter preparation (done once at init)
# ----------------------------------------------------------------------------
@partial(jax.jit, static_argnames=("out_num",))
def _pooling_voting_forward(x, wc_t, bc_p, sel_p, w1_t, b1_p, *, out_num):
    n, seq_len, c_in = x.shape
    f_pad = wc_t.shape[1]
    out_pad = w1_t.shape[1]
    cdt = wc_t.dtype
    x_elt = jnp.dtype(cdt).itemsize

    # Free metadata reshape of the contiguous input: feed the MXU with
    # (TN*L, C) rows directly, no in-kernel input reshape.
    x2 = x.astype(cdt).reshape(n * seq_len, c_in)

    tn = _choose_tile_n(n, seq_len, c_in, f_pad, out_pad, x_elt)
    grid_n = pl.cdiv(n, tn)
    n_pad = grid_n * tn
    if n_pad != n:  # rare fallback; _choose_tile_n prefers divisors of N
        x2 = jnp.pad(x2, ((0, (n_pad - n) * seq_len), (0, 0)))

    cost = pl.CostEstimate(
        flops=2 * n * seq_len * c_in * f_pad + 2 * n * f_pad * out_pad
              + 8 * n * f_pad,
        transcendentals=0,
        bytes_accessed=(n * seq_len * c_in + c_in * f_pad + f_pad * out_pad)
                       * x_elt + 4 * (4 * f_pad + out_pad + n * out_pad),
    )

    out = pl.pallas_call(
        _pooling_voting_kernel,
        out_shape=jax.ShapeDtypeStruct((grid_n, tn, out_pad), jnp.float32),
        grid_spec=pltpu.PrefetchScalarGridSpec(
            num_scalar_prefetch=0,
            grid=(grid_n,),
            in_specs=[
                pl.BlockSpec((tn * seq_len, c_in), lambda g: (g, 0)),
                pl.BlockSpec((c_in, f_pad), lambda g: (0, 0)),
                pl.BlockSpec((1, f_pad), lambda g: (0, 0)),
                pl.BlockSpec((3, f_pad), lambda g: (0, 0)),
                pl.BlockSpec((f_pad, out_pad), lambda g: (0, 0)),
                pl.BlockSpec((1, out_pad), lambda g: (0, 0)),
            ],
            out_specs=pl.BlockSpec((1, tn, out_pad), lambda g: (g, 0, 0)),
        ),
        compiler_params=pltpu.CompilerParams(
            dimension_semantics=("parallel",),
            # Explicit scoped-VMEM limit: covers the 24 MiB tile budget on v5e
            # (16 MiB default) and stays well under v7x's 64 MiB physical VMEM.
            vmem_limit_bytes=32 * 1024 * 1024,
        ),
        cost_estimate=cost,
    )(x2, wc_t, bc_p, sel_p, w1_t, b1_p)

    out = out.reshape(n_pad, out_pad)[:n, :out_num]
    return out.reshape(1, n, out_num)        # PyTorch: out.unsqueeze(0)


def make_pooling_voting(wc, bc, selector, w1, b1, compute_dtype=jnp.bfloat16):
    """Precompute the parameter glue ONCE (transpose, softmax(pool_selector),
    lane padding, bf16 casts) and return a jitted forward(x) callable.
    Pass compute_dtype=jnp.float32 for exact-precision runs."""
    feat, c_in = wc.shape
    out_num = w1.shape[0]
    f_pad = _round_up(feat, 128)
    out_pad = _round_up(out_num, 128)

    wc_t = jnp.zeros((c_in, f_pad), compute_dtype).at[:, :feat].set(
        wc.T.astype(compute_dtype))
    bc_p = jnp.zeros((1, f_pad), jnp.float32).at[:, :feat].set(
        bc.reshape(1, feat).astype(jnp.float32))
    sel = jax.nn.softmax(selector.astype(jnp.float32), axis=1).T      # (3, F)
    sel_p = jnp.zeros((3, f_pad), jnp.float32).at[:, :feat].set(sel)
    w1_t = jnp.zeros((f_pad, out_pad), compute_dtype).at[:feat, :out_num].set(
        w1.T.astype(compute_dtype))
    b1_p = jnp.zeros((1, out_pad), jnp.float32).at[:, :out_num].set(
        b1.reshape(1, out_num).astype(jnp.float32))

    def forward(x):
        return _pooling_voting_forward(x, wc_t, bc_p, sel_p, w1_t, b1_p,
                                       out_num=out_num)

    return forward


# ----------------------------------------------------------------------------
# Pure-JAX reference mirroring the PyTorch forward (f32 throughout)
# ----------------------------------------------------------------------------
def _reference(x, wc, bc, selector, w1, b1):
    y = jnp.einsum("nlc,fc->nfl", x, wc) + bc[None, :, None]          # (N, F, L)
    gap = jnp.mean(y, axis=2)
    mx = jnp.max(y, axis=2)
    mn = jnp.min(y, axis=2)
    s = jax.nn.softmax(selector, axis=1)                              # (F, 3)
    pooled = gap * s[:, 0] + mx * s[:, 1] + mn * s[:, 2]              # (N, F)
    out = pooled @ w1.T + b1                                          # (N, OUT)
    return out[None]                                                  # (1, N, OUT)


if __name__ == "__main__":
    # small config consistent with the module:
    #   sum(data_length) -> C_in = 16, feature_dim = 32, sum(class_length) -> out_num = 10
    N, L, C, F, OUT = 2, 16, 16, 32, 10

    key = jax.random.PRNGKey(0)
    kx, kwc, kbc, ksel, kw1, kb1 = jax.random.split(key, 6)

    x = jax.random.normal(kx, (N, L, C), dtype=jnp.float32)
    # deterministic synthetic "weights" (not loaded from a checkpoint)
    wc = jax.random.normal(kwc, (F, C), dtype=jnp.float32) * 0.1      # Conv1d weight (k=1, squeezed)
    bc = jax.random.normal(kbc, (F,), dtype=jnp.float32) * 0.1        # Conv1d bias
    selector = jax.random.normal(ksel, (F, 3), dtype=jnp.float32)     # pool_selector parameter
    w1 = jax.random.normal(kw1, (OUT, F), dtype=jnp.float32) * 0.1    # fc1 weight
    b1 = jax.random.normal(kb1, (OUT,), dtype=jnp.float32) * 0.1      # fc1 bias

    forward = make_pooling_voting(wc, bc, selector, w1, b1)           # bf16 compute, f32 accumulate
    out = jax.block_until_ready(forward(x))

    ref = _reference(x, wc, bc, selector, w1, b1)
    assert out.shape == (1, N, OUT), out.shape
    # bf16 operands with f32 accumulation vs a pure-f32 reference -> loosened tolerance.
    assert jnp.allclose(out, ref, atol=5e-2, rtol=5e-2), \
        float(jnp.max(jnp.abs(out - ref)))

    print("KERNEL_OK")
</pallas_src>

<mosaic_0001>
module attributes {stable_mosaic.version = 11 : i64} {
  func.func @_pooling_voting_kernel(%arg0: i32, %arg1: memref<32x16xbf16, #tpu.memory_space<vmem>>, %arg2: memref<16x128xbf16, #tpu.memory_space<vmem>>, %arg3: memref<1x128xf32, #tpu.memory_space<vmem>>, %arg4: memref<3x128xf32, #tpu.memory_space<vmem>>, %arg5: memref<128x128xbf16, #tpu.memory_space<vmem>>, %arg6: memref<1x128xf32, #tpu.memory_space<vmem>>, %arg7: memref<1x2x128xf32, #tpu.memory_space<vmem>>) attributes {dimension_semantics = [#tpu.dimension_semantics<parallel>], iteration_bounds = array<i64: 1>, scalar_prefetch = 0 : i64, scratch_operands = 0 : i64, tpu.core_type = #tpu.core_type<tc>, window_params = [{transform_indices = @transform_0, window_bounds = array<i64: 32, 16>}, {pipeline_mode = #tpu.pipeline_mode<synchronous>, transform_indices = @transform_1, window_bounds = array<i64: 16, 128>}, {pipeline_mode = #tpu.pipeline_mode<synchronous>, transform_indices = @transform_2, window_bounds = array<i64: 1, 128>}, {pipeline_mode = #tpu.pipeline_mode<synchronous>, transform_indices = @transform_3, window_bounds = array<i64: 3, 128>}, {pipeline_mode = #tpu.pipeline_mode<synchronous>, transform_indices = @transform_4, window_bounds = array<i64: 128, 128>}, {pipeline_mode = #tpu.pipeline_mode<synchronous>, transform_indices = @transform_5, window_bounds = array<i64: 1, 128>}, {transform_indices = @transform_6, window_bounds = array<i64: 1, 2, 128>}]} {
    %c0 = arith.constant 0 : index
    %c0_0 = arith.constant 0 : index
    %0 = vector.load %arg1[%c0, %c0_0] : memref<32x16xbf16, #tpu.memory_space<vmem>>, vector<32x16xbf16>
    %c0_1 = arith.constant 0 : index
    %c0_2 = arith.constant 0 : index
    %1 = vector.load %arg2[%c0_1, %c0_2] : memref<16x128xbf16, #tpu.memory_space<vmem>>, vector<16x128xbf16>
    %cst = arith.constant dense<0.000000e+00> : vector<32x128xf32>
    %2 = tpu.matmul %0, %1, %cst {dimension_numbers = #tpu.dot_dimension_numbers<[1], [0], [0], [1], [0, 0, 1, 1], [], []>} : vector<32x16xbf16>, vector<16x128xbf16>, vector<32x128xf32> -> vector<32x128xf32>
    %c0_3 = arith.constant 0 : index
    %c0_4 = arith.constant 0 : index
    %3 = vector.load %arg3[%c0_3, %c0_4] : memref<1x128xf32, #tpu.memory_space<vmem>>, vector<1x128xf32>
    %4 = vector.broadcast %3 : vector<1x128xf32> to vector<32x128xf32>
    %5 = arith.addf %2, %4 : vector<32x128xf32>
    %6 = vector.shape_cast %5 : vector<32x128xf32> to vector<2x16x128xf32>
    %cst_5 = arith.constant dense<0.000000e+00> : vector<2x128xf32>
    %7 = vector.multi_reduction <add>, %6, %cst_5 [1] : vector<2x16x128xf32> to vector<2x128xf32>
    %cst_6 = arith.constant 6.250000e-02 : f32
    %8 = vector.broadcast %cst_6 : f32 to vector<2x128xf32>
    %9 = arith.mulf %7, %8 : vector<2x128xf32>
    %cst_7 = arith.constant dense<0xFF800000> : vector<2x128xf32>
    %10 = vector.multi_reduction <maximumf>, %6, %cst_7 [1] : vector<2x16x128xf32> to vector<2x128xf32>
    %cst_8 = arith.constant dense<0x7F800000> : vector<2x128xf32>
    %11 = vector.multi_reduction <minimumf>, %6, %cst_8 [1] : vector<2x16x128xf32> to vector<2x128xf32>
    %c0_9 = arith.constant 0 : index
    %c0_10 = arith.constant 0 : index
    %12 = vector.load %arg4[%c0_9, %c0_10] : memref<3x128xf32, #tpu.memory_space<vmem>>, vector<3x128xf32>
    %13 = vector.extract_strided_slice %12 {offsets = [0, 0], sizes = [1, 128], strides = [1, 1]} : vector<3x128xf32> to vector<1x128xf32>
    %14 = vector.broadcast %13 : vector<1x128xf32> to vector<2x128xf32>
    %15 = arith.mulf %9, %14 : vector<2x128xf32>
    %16 = vector.extract_strided_slice %12 {offsets = [1, 0], sizes = [1, 128], strides = [1, 1]} : vector<3x128xf32> to vector<1x128xf32>
    %17 = vector.broadcast %16 : vector<1x128xf32> to vector<2x128xf32>
    %18 = arith.mulf %10, %17 : vector<2x128xf32>
    %19 = arith.addf %15, %18 : vector<2x128xf32>
    %20 = vector.extract_strided_slice %12 {offsets = [2, 0], sizes = [1, 128], strides = [1, 1]} : vector<3x128xf32> to vector<1x128xf32>
    %21 = vector.broadcast %20 : vector<1x128xf32> to vector<2x128xf32>
    %22 = arith.mulf %11, %21 : vector<2x128xf32>
    %23 = arith.addf %19, %22 : vector<2x128xf32>
    %24 = arith.truncf %23 : vector<2x128xf32> to vector<2x128xbf16>
    %c0_11 = arith.constant 0 : index
    %c0_12 = arith.constant 0 : index
    %25 = vector.load %arg5[%c0_11, %c0_12] : memref<128x128xbf16, #tpu.memory_space<vmem>>, vector<128x128xbf16>
    %cst_13 = arith.constant dense<0.000000e+00> : vector<2x128xf32>
    %26 = tpu.matmul %24, %25, %cst_13 {dimension_numbers = #tpu.dot_dimension_numbers<[1], [0], [0], [1], [0, 0, 1, 1], [], []>} : vector<2x128xbf16>, vector<128x128xbf16>, vector<2x128xf32> -> vector<2x128xf32>
    %c0_14 = arith.constant 0 : index
    %c0_15 = arith.constant 0 : index
    %27 = vector.load %arg6[%c0_14, %c0_15] : memref<1x128xf32, #tpu.memory_space<vmem>>, vector<1x128xf32>
    %28 = vector.broadcast %27 : vector<1x128xf32> to vector<2x128xf32>
    %29 = arith.addf %26, %28 : vector<2x128xf32>
    %c0_16 = arith.constant 0 : index
    %c0_17 = arith.constant 0 : index
    %c0_18 = arith.constant 0 : index
    %30 = vector.load %arg7[%c0_16, %c0_17, %c0_18] : memref<1x2x128xf32, #tpu.memory_space<vmem>>, vector<1x2x128xf32>
    %31 = vector.shape_cast %30 : vector<1x2x128xf32> to vector<2x128xf32>
    %32 = vector.shape_cast %29 : vector<2x128xf32> to vector<1x2x128xf32>
    tpu.vector_store %arg7[%c0_16, %c0_17, %c0_18], %32 {strides = array<i32>} : memref<1x2x128xf32, #tpu.memory_space<vmem>>, vector<1x2x128xf32>,
    return
  }
  func.func @transform_0(%arg0: i32) -> (i32, i32) {
    %c0_i32 = arith.constant 0 : i32
    %c0_i32_0 = arith.constant 0 : i32
    return %arg0, %c0_i32 : i32, i32
  }
  func.func @transform_1(%arg0: i32) -> (i32, i32) {
    %c0_i32 = arith.constant 0 : i32
    %c0_i32_0 = arith.constant 0 : i32
    %c0_i32_1 = arith.constant 0 : i32
    return %c0_i32, %c0_i32_0 : i32, i32
  }
  func.func @transform_2(%arg0: i32) -> (i32, i32) {
    %c0_i32 = arith.constant 0 : i32
    %c0_i32_0 = arith.constant 0 : i32
    %c0_i32_1 = arith.constant 0 : i32
    return %c0_i32, %c0_i32_0 : i32, i32
  }
  func.func @transform_3(%arg0: i32) -> (i32, i32) {
    %c0_i32 = arith.constant 0 : i32
    %c0_i32_0 = arith.constant 0 : i32
    %c0_i32_1 = arith.constant 0 : i32
    return %c0_i32, %c0_i32_0 : i32, i32
  }
  func.func @transform_4(%arg0: i32) -> (i32, i32) {
    %c0_i32 = arith.constant 0 : i32
    %c0_i32_0 = arith.constant 0 : i32
    %c0_i32_1 = arith.constant 0 : i32
    return %c0_i32, %c0_i32_0 : i32, i32
  }
  func.func @transform_5(%arg0: i32) -> (i32, i32) {
    %c0_i32 = arith.constant 0 : i32
    %c0_i32_0 = arith.constant 0 : i32
    %c0_i32_1 = arith.constant 0 : i32
    return %c0_i32, %c0_i32_0 : i32, i32
  }
  func.func @transform_6(%arg0: i32) -> (i32, i32, i32) {
    %c0_i32 = arith.constant 0 : i32
    %c0_i32_0 = arith.constant 0 : i32
    %c0_i32_1 = arith.constant 0 : i32
    return %arg0, %c0_i32, %c0_i32_0 : i32, i32, i32
  }
}

</mosaic_0001>

<llo_original>
// kernel: _pooling_voting_forward.1
$region0: #{_pooling_voting_forward.1}
  #allocation0 [shape = 'u32[]', space=smem, size = 0x4, offset = 0x4, fixed_abs, tag = 'smem constant byte address 0x4 - core index']
  #allocation1 [shape = 'u32[144,128]{1,0:T(1,128)}', space=vmem, size = 0x12000, scoped, tag = 'internal scratch']
  %s0 = inlined_call_operand.vmem [shape: bf16[32,16], index: 0, kind: input, shape index: {}]
  %s1 = inlined_call_operand.hbm [shape: bf16[16,128], index: 1, kind: input, shape index: {}]
  %s2 = inlined_call_operand.vmem [shape: f32[1,128], index: 2, kind: input, shape index: {}]
  %s3 = inlined_call_operand.hbm [shape: f32[3,128], index: 3, kind: input, shape index: {}]
  %s4 = inlined_call_operand.vmem [shape: bf16[128,128], index: 4, kind: input, shape index: {}]
  %s5 = inlined_call_operand.vmem [shape: f32[1,128], index: 5, kind: input, shape index: {}]
  %s6 = inlined_call_operand.vmem [shape: f32[1,2,128], index: 6, kind: output, shape index: {}]
  %s7 = sld [smem:[#allocation0]]
  $region42: #{_pooling_voting_forward.1} parent=0
    _
  %s9 = ssub.s32 1, %s7
  %s10 = scalar_select 0, %s9, %s7
  $region1: #{_pooling_voting_forward.1} parent=0
    #allocation2 [shape = 'u8[4096]{0}', space=vmem, size = 0x1000, scoped, tag = 'input window, operand 1, single buffered']
    #allocation3 [shape = 's32[1]{0}', space=sflag, size = 0x4, scoped, tag = 'scoped memory for _pooling_voting_forward.1']
    #allocation4 [shape = 'u8[2048]{0}', space=vmem, size = 0x800, scoped, tag = 'input window, operand 3, single buffered']
    #allocation5 [shape = 's32[1]{0}', space=sflag, size = 0x4, scoped, tag = 'scoped memory for _pooling_voting_forward.1']
    %11 = vsyncpa [#allocation3], 0
    %12 = vsyncpa [#allocation5], 0
    // Predicated region
    $region2: #{_pooling_voting_forward.1} parent=1 // pred_check
      _
    $region3: #{_pooling_voting_forward.1} parent=1 // pred_check_branch
      %14 = sbr.rel (0) target = $region5
    $region4: #{_pooling_voting_forward.1} parent=1 // pred_region
      _
    $region5: #{_pooling_voting_forward.1} parent=1 // pred_fallthru
      _
    // Predicated region
    $region6: #{_pooling_voting_forward.1} parent=1 // pred_check
      _
    $region7: #{_pooling_voting_forward.1} parent=1 // pred_check_branch
      %16 = sbr.rel (0) target = $region9
    $region8: #{_pooling_voting_forward.1} parent=1 // pred_region
      %s18 = ssub.s32 128, 128
      %19 = vsyncadd [#allocation3], %s18
      %s20 = sshll.u32 [#allocation2], 4
      %s21 = int_to_ptr.vmem [resolvable:$true] %s20
      %26 = dma.hbm_to_vmem [thread:$0]  %s1, 128, %s21, [#allocation3], 64, 64, 4
    $region9: #{_pooling_voting_forward.1} parent=1 // pred_fallthru
      _
    // Predicated region
    $region10: #{_pooling_voting_forward.1} parent=1 // pred_check
      _
    $region11: #{_pooling_voting_forward.1} parent=1 // pred_check_branch
      %28 = sbr.rel (0) target = $region13
    $region12: #{_pooling_voting_forward.1} parent=1 // pred_region
      _
    $region13: #{_pooling_voting_forward.1} parent=1 // pred_fallthru
      _
    // Predicated region
    $region14: #{_pooling_voting_forward.1} parent=1 // pred_check
      _
    $region15: #{_pooling_voting_forward.1} parent=1 // pred_check_branch
      %30 = sbr.rel (0) target = $region17
    $region16: #{_pooling_voting_forward.1} parent=1 // pred_region
      %s32 = ssub.s32 64, 64
      %33 = vsyncadd [#allocation5], %s32
      %s35 = sshll.u32 [#allocation4], 4
      %s36 = int_to_ptr.vmem [resolvable:$true] %s35
      %38 = dma.hbm_to_vmem [thread:$0]  %s3, 64, %s36, [#allocation5]
    $region17: #{_pooling_voting_forward.1} parent=1 // pred_fallthru
      _
    // Predicated region
    $region18: #{_pooling_voting_forward.1} parent=1 // pred_check
      _
    $region19: #{_pooling_voting_forward.1} parent=1 // pred_check_branch
      %40 = sbr.rel (0) target = $region21
    $region20: #{_pooling_voting_forward.1} parent=1 // pred_region
      _
    $region21: #{_pooling_voting_forward.1} parent=1 // pred_fallthru
      _
    // Predicated region
    $region22: #{_pooling_voting_forward.1} parent=1 // pred_check
      _
    $region23: #{_pooling_voting_forward.1} parent=1 // pred_check_branch
      %42 = sbr.rel (0) target = $region25
    $region24: #{_pooling_voting_forward.1} parent=1 // pred_region
      _
    $region25: #{_pooling_voting_forward.1} parent=1 // pred_fallthru
      _
    // Predicated region
    $region26: #{_pooling_voting_forward.1} parent=1 // pred_check
      _
    $region27: #{_pooling_voting_forward.1} parent=1 // pred_check_branch
      %44 = sbr.rel (0) target = $region29
    $region28: #{_pooling_voting_forward.1} parent=1 // pred_region
      %45 = dma.done [#allocation3], 128
    $region29: #{_pooling_voting_forward.1} parent=1 // pred_fallthru
      _
    // Predicated region
    $region30: #{_pooling_voting_forward.1} parent=1 // pred_check
      _
    $region31: #{_pooling_voting_forward.1} parent=1 // pred_check_branch
      %47 = sbr.rel (0) target = $region33
    $region32: #{_pooling_voting_forward.1} parent=1 // pred_region
      %48 = dma.done [#allocation5], 64
    $region33: #{_pooling_voting_forward.1} parent=1 // pred_fallthru
      _
    %v50 = vld [vmem:[%s0] sm:$0xf]
    %v51 = vld [vmem:[%s0 + $0x4] sm:$0xf]
    %v52 = vld [vmem:[%s0 + $0x8] sm:$0xf]
    %v53 = vld [vmem:[%s0 + $0xc] sm:$0xf]
    %v54 = vld [vmem:[#allocation2] sm:$0xf]
    %v55 = vld [vmem:[#allocation2 + $0x4] sm:$0xf]
    %v56 = vld [vmem:[%s2] sm:$0x1]
    %v58 = vlaneseq
    %v59 = vshrl.u32 %v58, 7
    %v60 = vsub.s32 0, %v59
    %v61 = vrot.slane %v56, %v60
    %v67 = vunpack.c.l.b16 %v50
    %v68 = vunpack.c.l.b16 %v51
    %v69 = vunpack.c.l.b16 %v52
    %v70 = vunpack.c.l.b16 %v53
    %v71 = vpack.c.b16 %v68, %v67
    %v72 = vpack.c.b16 %v70, %v69
    %v75 = vunpack.c.l.b16 %v54
    %v76 = vunpack.c.l.b16 %v55
    %v77 = vpack.c.b16 %v76, %v75
    %vm79 = vcmask 130048
    %v81 = vsel %vm79, %v71, 0
    %v84 = vsel %vm79, %v72, 0
    %86 = vmatprep.subr.bf16.mxu0 0
    %87 = vmatpush1.bf16.msra.mxu0 %v77
    %88 = vmatprep.subr.bf16.mxu0 0
    %89 = vmatpush1.bf16.msra.mxu0 0
    %90 = vmatprep.subr.bf16.mxu0 0
    %91 = vmatpush1.bf16.msra.mxu0 0
    %92 = vmatprep.subr.bf16.mxu0 0
    %93 = vmatpush1.bf16.msra.mxu0 0
    %94 = vmatprep.subr.bf16.mxu0 0
    %95 = vmatpush1.bf16.msra.mxu0 0
    %96 = vmatprep.subr.bf16.mxu0 0
    %97 = vmatpush1.bf16.msra.mxu0 0
    %98 = vmatprep.subr.bf16.mxu0 0
    %99 = vmatpush1.bf16.msra.mxu0 0
    %100 = vmatprep.subr.bf16.mxu0 0
    %101 = vmatpush1.bf16.msra.mxu0 0
    %102 = vmatprep.subr.bf16.mxu0 0
    %103 = vmatpush1.bf16.msra.mxu0 0
    %104 = vmatprep.subr.bf16.mxu0 0
    %105 = vmatpush1.bf16.msra.mxu0 0
    %106 = vmatprep.subr.bf16.mxu0 0
    %107 = vmatpush1.bf16.msra.mxu0 0
    %108 = vmatprep.subr.bf16.mxu0 0
    %109 = vmatpush1.bf16.msra.mxu0 0
    %110 = vmatprep.subr.bf16.mxu0 0
    %111 = vmatpush1.bf16.msra.mxu0 0
    %112 = vmatprep.subr.bf16.mxu0 0
    %113 = vmatpush1.bf16.msra.mxu0 0
    %114 = vmatprep.subr.bf16.mxu0 0
    %115 = vmatpush1.bf16.msra.mxu0 0
    %116 = vmatprep.subr.bf16.mxu0 0
    %117 = vmatpush1.bf16.msra.mxu0 0
    %118 = vmatprep.mubr.bf16.mxu0 0
    %119 = vmatmul.mubr.bf16.gmra.mrb[0].mxu0 %v81
    %v120 = vpop.f32.mrb[0].mxu0
    %v121 = vadd.f32 %v61, %v120
    %v122 = vpop.f32.mrb[0].mxu0
    %v123 = vpop.f32.mrb[0].mxu0
    %v124 = vadd.f32 %v61, %v123
    %v125 = vpop.f32.mrb[0].mxu0
    %126 = vmatprep.mubr.bf16.mxu0 0
    %127 = vmatmul.mubr.bf16.gmra.mrb[0].mxu0 %v84
    %v128 = vpop.f32.mrb[0].mxu0
    %v129 = vadd.f32 %v61, %v128
    %v130 = vpop.f32.mrb[0].mxu0
    %v131 = vpop.f32.mrb[0].mxu0
    %v132 = vadd.f32 %v61, %v131
    %v133 = vpop.f32.mrb[0].mxu0
    %134 = vdwg.mxu0
    %v135 = vadd.f32 %v121, %v124
    %v136 = vrot.slane %v135, 4
    %v137 = vadd.f32 %v135, %v136
    %v138 = vrot.slane %v137, 2
    %v139 = vadd.f32 %v137, %v138
    %v140 = vrot.slane %v139, 1
    %v141 = vadd.f32 %v139, %v140
    %v142 = vadd.f32 %v129, %v132
    %v143 = vrot.slane %v142, 4
    %v144 = vadd.f32 %v142, %v143
    %v145 = vrot.slane %v144, 2
    %v146 = vadd.f32 %v144, %v145
    %v147 = vrot.slane %v146, 1
    %v148 = vadd.f32 %v146, %v147
    %v149 = vmul.f32 %v141, 0.0625
    %v150 = vmul.f32 %v148, 0.0625
    %v151 = vmax.f32 %v121, %v124
    %v152 = vrot.slane %v151, 4
    %v153 = vmax.f32 %v151, %v152
    %v154 = vrot.slane %v153, 2
    %v155 = vmax.f32 %v153, %v154
    %v156 = vrot.slane %v155, 1
    %v157 = vmax.f32 %v155, %v156
    %v158 = vmax.f32 %v129, %v132
    %v159 = vrot.slane %v158, 4
    %v160 = vmax.f32 %v158, %v159
    %v161 = vrot.slane %v160, 2
    %v162 = vmax.f32 %v160, %v161
    %v163 = vrot.slane %v162, 1
    %v164 = vmax.f32 %v162, %v163
    %v165 = vmin.f32 %v121, %v124
    %v166 = vrot.slane %v165, 4
    %v167 = vmin.f32 %v165, %v166
    %v168 = vrot.slane %v167, 2
    %v169 = vmin.f32 %v167, %v168
    %v170 = vrot.slane %v169, 1
    %v171 = vmin.f32 %v169, %v170
    %v172 = vmin.f32 %v129, %v132
    %v173 = vrot.slane %v172, 4
    %v174 = vmin.f32 %v172, %v173
    %v175 = vrot.slane %v174, 2
    %v176 = vmin.f32 %v174, %v175
    %v177 = vrot.slane %v176, 1
    %v178 = vmin.f32 %v176, %v177
    %v179 = vld [vmem:[#allocation4] sm:$0x7]
    %v180 = vlaneseq
    %v181 = vshrl.u32 %v180, 7
    %v182 = vsub.s32 0, %v181
    %v183 = vrot.slane %v179, %v182
    %v184 = vmul.f32 %v149, %v183
    %v185 = vmul.f32 %v150, %v183
    %v186 = vlaneseq
    %v187 = vshrl.u32 %v186, 7
    %v188 = vsub.s32 1, %v187
    %v189 = vrot.slane %v179, %v188
    %v190 = vmul.f32 %v157, %v189
    %v191 = vmul.f32 %v164, %v189
    %v192 = vadd.f32 %v184, %v190
    %v193 = vadd.f32 %v185, %v191
    %v194 = vlaneseq
    %v195 = vshrl.u32 %v194, 7
    %v196 = vsub.s32 2, %v195
    %v197 = vrot.slane %v179, %v196
    %v198 = vmul.f32 %v171, %v197
    %v199 = vmul.f32 %v178, %v197
    %v200 = vadd.f32 %v192, %v198
    %v201 = vadd.f32 %v193, %v199
    %v202 = vpack.c.bf16 %v200, %v200
    %v203 = vpack.c.bf16 %v201, %v201
    %v204 = vld [vmem:[%s4] sm:$0xf]
    %v205 = vld [vmem:[%s4 + $0x4] sm:$0xf]
    %v206 = vld [vmem:[%s4 + $0x8] sm:$0xf]
    %v207 = vld [vmem:[%s4 + $0xc] sm:$0xf]
    %v208 = vld [vmem:[%s4 + $0x10] sm:$0xf]
    %v209 = vld [vmem:[%s4 + $0x14] sm:$0xf]
    %v210 = vld [vmem:[%s4 + $0x18] sm:$0xf]
    %v211 = vld [vmem:[%s4 + $0x1c] sm:$0xf]
    %v212 = vld [vmem:[%s4 + $0x20] sm:$0xf]
    %v213 = vld [vmem:[%s4 + $0x24] sm:$0xf]
    %v214 = vld [vmem:[%s4 + $0x28] sm:$0xf]
    %v215 = vld [vmem:[%s4 + $0x2c] sm:$0xf]
    %v216 = vld [vmem:[%s4 + $0x30] sm:$0xf]
    %v217 = vld [vmem:[%s4 + $0x34] sm:$0xf]
    %v218 = vld [vmem:[%s4 + $0x38] sm:$0xf]
    %v219 = vld [vmem:[%s4 + $0x3c] sm:$0xf]
    %v220 = vld [vmem:[%s5] sm:$0x1]
    %v222 = vlaneseq
    %v223 = vshrl.u32 %v222, 7
    %v224 = vsub.s32 0, %v223
    %v225 = vrot.slane %v220, %v224
    %v229 = vunpack.c.l.b16 %v202
    %v230 = vunpack.c.l.b16 %v203
    %v231 = vrot.slane %v230, 7
    %vm232 = vcmask 1041409
    %v233 = vsel %vm232, %v231, %v229
    %v234 = vpack.c.b16 %v233, %v233
    %v252 = vunpack.c.l.b16 %v204
    %v253 = vunpack.c.l.b16 %v205
    %v254 = vunpack.c.l.b16 %v206
    %v255 = vunpack.c.l.b16 %v207
    %v256 = vunpack.c.l.b16 %v208
    %v257 = vunpack.c.l.b16 %v209
    %v258 = vunpack.c.l.b16 %v210
    %v259 = vunpack.c.l.b16 %v211
    %v260 = vunpack.c.l.b16 %v212
    %v261 = vunpack.c.l.b16 %v213
    %v262 = vunpack.c.l.b16 %v214
    %v263 = vunpack.c.l.b16 %v215
    %v264 = vunpack.c.l.b16 %v216
    %v265 = vunpack.c.l.b16 %v217
    %v266 = vunpack.c.l.b16 %v218
    %v267 = vunpack.c.l.b16 %v219
    %v268 = vpack.c.b16 %v253, %v252
    %v269 = vpack.c.b16 %v255, %v254
    %v270 = vpack.c.b16 %v257, %v256
    %v271 = vpack.c.b16 %v259, %v258
    %v272 = vpack.c.b16 %v261, %v260
    %v273 = vpack.c.b16 %v263, %v262
    %v274 = vpack.c.b16 %v265, %v264
    %v275 = vpack.c.b16 %v267, %v266
    %284 = vmatprep.subr.bf16.mxu0 0
    %285 = vmatpush1.bf16.msra.mxu0 %v268
    %286 = vmatprep.subr.bf16.mxu0 0
    %287 = vmatpush1.bf16.msra.mxu0 %v269
    %288 = vmatprep.subr.bf16.mxu0 0
    %289 = vmatpush1.bf16.msra.mxu0 %v270
    %290 = vmatprep.subr.bf16.mxu0 0
    %291 = vmatpush1.bf16.msra.mxu0 %v271
    %292 = vmatprep.subr.bf16.mxu0 0
    %293 = vmatpush1.bf16.msra.mxu0 %v272
    %294 = vmatprep.subr.bf16.mxu0 0
    %295 = vmatpush1.bf16.msra.mxu0 %v273
    %296 = vmatprep.subr.bf16.mxu0 0
    %297 = vmatpush1.bf16.msra.mxu0 %v274
    %298 = vmatprep.subr.bf16.mxu0 0
    %299 = vmatpush1.bf16.msra.mxu0 %v275
    %300 = vmatprep.subr.bf16.mxu0 0
    %301 = vmatpush1.bf16.msra.mxu0 0
    %302 = vmatprep.subr.bf16.mxu0 0
    %303 = vmatpush1.bf16.msra.mxu0 0
    %304 = vmatprep.subr.bf16.mxu0 0
    %305 = vmatpush1.bf16.msra.mxu0 0
    %306 = vmatprep.subr.bf16.mxu0 0
    %307 = vmatpush1.bf16.msra.mxu0 0
    %308 = vmatprep.subr.bf16.mxu0 0
    %309 = vmatpush1.bf16.msra.mxu0 0
    %310 = vmatprep.subr.bf16.mxu0 0
    %311 = vmatpush1.bf16.msra.mxu0 0
    %312 = vmatprep.subr.bf16.mxu0 0
    %313 = vmatpush1.bf16.msra.mxu0 0
    %314 = vmatprep.subr.bf16.mxu0 0
    %315 = vmatpush1.bf16.msra.mxu0 0
    %316 = vmatprep.mubr.bf16.mxu0 0
    %317 = vmatmul.mubr.bf16.gmra.mrb[0].mxu0 %v234
    %v318 = vpop.f32.mrb[0].mxu0
    %v319 = vadd.f32 %v225, %v318
    %v320 = vpop.f32.mrb[0].mxu0
    %v321 = vpop.f32.mrb[0].mxu0
    %v322 = vpop.f32.mrb[0].mxu0
    %323 = vdwg.mxu0
    %324 = vst [vmem:[%s6] sm:$0x3] %v319
    // Predicated region
    $region34: #{_pooling_voting_forward.1} parent=1 // pred_check
      _
    $region35: #{_pooling_voting_forward.1} parent=1 // pred_check_branch
      %326 = sbr.rel (0) target = $region37
    $region36: #{_pooling_voting_forward.1} parent=1 // pred_region
      _
    $region37: #{_pooling_voting_forward.1} parent=1 // pred_fallthru
      _
    // Predicated region
    $region38: #{_pooling_voting_forward.1} parent=1 // pred_check
      _
    $region39: #{_pooling_voting_forward.1} parent=1 // pred_check_branch
      %328 = sbr.rel (0) target = $region41
    $region40: #{_pooling_voting_forward.1} parent=1 // pred_region
      _
    $region41: #{_pooling_voting_forward.1} parent=1 // pred_fallthru
      _
    %329 = vsyncpa [#allocation3], 1
    %330 = vsyncpa [#allocation5], 1

</llo_original>
